<compile_context>
chip_gen: v7x
topology: tpu7x:2x2x1
jax: 0.10.0
libtpu: 0.0.40
codegen_flags: <defaults>
</compile_context>

<pallas_src>
import math

import jax
import jax.numpy as jnp
from jax import lax
from jax.experimental import pallas as pl
from jax.experimental.pallas import tpu as pltpu


def _round_up(v, m):
    return (v + m - 1) // m * m


def _sublane_multiple(dtype):
    # f32 -> 8, bf16 -> 16, int8/fp8 -> 32 (packed sublanes).
    return {4: 8, 2: 16, 1: 32}.get(jnp.dtype(dtype).itemsize, 8)


def _choose_tk(D, tk_max):
    """Feature-axis tile.  Must divide D exactly (the contracted dim is never
    block-padded -> no garbage in the accumulation) and be a multiple of 128
    whenever it is an actual split."""
    if D <= tk_max:
        return D
    for tk in range(tk_max - tk_max % 128, 0, -128):
        if D % tk == 0:
            return tk
    return D  # no clean 128-multiple divisor -> keep the full feature dim


def _vmem_cap_bytes():
    phys = 64 << 20  # conservative default (v7x physical VMEM per TC)
    try:
        info = pltpu.get_tpu_info()
        phys = int(getattr(info, "vmem_capacity_bytes", phys) or phys)
    except Exception:
        pass
    return (phys * 3) // 4  # ~48 MiB on v7x, ~96 MiB on v5e/v6e


def _make_kernel(num_k):
    def _dot(x, w):
        # Contract the shared feature (last) axis of both operands directly:
        # x (tm, tk) . w (tn, tk) -> (tm, tn), i.e. x @ w.T with f32 accumulation.
        # NOTE: if pl.lower_as_mlir shows Mosaic relayouting a packed RHS tile,
        # keep the weight pre-transposed to [D, C] persistently outside this call.
        return lax.dot_general(
            x, w,
            dimension_numbers=(((1,), (1,)), ((), ())),
            preferred_element_type=jnp.float32,
        )

    if num_k == 1:
        def kernel(x_ref, w_ref, out_ref):
            out_ref[...] = _dot(x_ref[...], w_ref[...]).astype(out_ref.dtype)
        return kernel

    def kernel(x_ref, w_ref, out_ref, acc_ref):
        k = pl.program_id(2)

        @pl.when(k == 0)
        def _():
            acc_ref[...] = jnp.zeros_like(acc_ref)

        acc_ref[...] += _dot(x_ref[...], w_ref[...])

        @pl.when(k == num_k - 1)
        def _():
            out_ref[...] = acc_ref[...].astype(out_ref.dtype)

    return kernel


def linear_header(x, label, weight, *, tm=512, tn=1024, tk_max=2048,
                  allow_fast_path=True):
    """LinearHeader.forward: logits = x @ weight.T (the label is ignored).

    x: [B, D], weight: [C, D] (torch.nn.Linear layout).  Returns [B, C]."""
    del label  # the module's forward ignores it entirely
    B, D = x.shape
    C, D_w = weight.shape
    assert D == D_w, "feature dims of input and weight must match"

    out_dtype = x.dtype

    # Tiny problems: one grid step dominated by pallas_call fixed overhead;
    # XLA's fused matmul is at least as fast.
    if allow_fast_path and (B * C * D) <= (1 << 20):
        return jnp.dot(x, weight.T,
                       preferred_element_type=jnp.float32).astype(out_dtype)

    sub = _sublane_multiple(x.dtype)
    tm = max(sub, min(_round_up(tm, sub), _round_up(B, sub)))
    tn = max(128, min(_round_up(tn, 128), _round_up(C, 128)))
    tk = _choose_tk(D, tk_max)

    grid_j = pl.cdiv(C, tn)   # class blocks (outer, many -> good megacore split)
    grid_i = pl.cdiv(B, tm)   # batch blocks
    grid_k = pl.cdiv(D, tk)   # feature blocks (== D // tk exactly)

    x_b = jnp.dtype(x.dtype).itemsize
    w_b = jnp.dtype(weight.dtype).itemsize
    o_b = jnp.dtype(out_dtype).itemsize

    def footprint(tm_, tn_):
        f = 2 * (tm_ * tk * x_b + tn_ * tk * w_b) + 2 * tm_ * tn_ * o_b
        if grid_k > 1:
            f += tm_ * tn_ * 4  # f32 accumulator scratch
        return f

    headroom = 4 << 20                 # Mosaic internal scratch headroom
    cap = _vmem_cap_bytes()
    # Shrink tiles (never tk: it must keep dividing D) instead of failing.
    while footprint(tm, tn) + headroom > cap and (tm > sub or tn > 128):
        if tm >= tn and tm > sub:
            tm = max(sub, _round_up(tm // 2, sub))
        elif tn > 128:
            tn = max(128, _round_up(tn // 2, 128))
        else:
            tm = max(sub, _round_up(tm // 2, sub))
        grid_i = pl.cdiv(B, tm)
        grid_j = pl.cdiv(C, tn)

    vmem_limit = int(min(max(footprint(tm, tn) + headroom, 16 << 20), cap))

    scratch = [] if grid_k == 1 else [pltpu.VMEM((tm, tn), jnp.float32)]

    cost = pl.CostEstimate(
        flops=2 * B * C * D,
        transcendentals=0,
        bytes_accessed=B * D * x_b + C * D * w_b + B * C * o_b,
    )

    out = pl.pallas_call(
        _make_kernel(grid_k),
        out_shape=jax.ShapeDtypeStruct((B, C), out_dtype),
        grid_spec=pltpu.PrefetchScalarGridSpec(
            num_scalar_prefetch=0,
            # Class axis OUTER: the (tn, tk) weight tile is resident across the
            # inner batch axis (full weight streamed from HBM exactly once when
            # grid_k == 1); x (the small operand) is what gets re-streamed.
            # K is the innermost reduction axis ("arbitrary").
            grid=(grid_j, grid_i, grid_k),
            in_specs=[
                pl.BlockSpec((tm, tk), lambda j, i, k: (i, k)),   # input rows
                pl.BlockSpec((tn, tk), lambda j, i, k: (j, k)),   # weight rows
            ],
            out_specs=pl.BlockSpec((tm, tn), lambda j, i, k: (i, j)),
            scratch_shapes=scratch,
        ),
        compiler_params=pltpu.CompilerParams(
            dimension_semantics=("parallel", "parallel", "arbitrary"),
            vmem_limit_bytes=vmem_limit,
        ),
        cost_estimate=cost,
    )(x, weight)
    return out


def _reference(x, weight):
    return jnp.dot(x, weight.T,
                   preferred_element_type=jnp.float32).astype(x.dtype)


if __name__ == "__main__":
    key = jax.random.PRNGKey(0)

    # 1) Module-consistent small shape (in_features=32, out_features=256,
    #    batch=16), forced through the Pallas kernel.
    B, D, C = 16, 32, 256
    k_x, k_w, k_l, key = jax.random.split(key, 4)
    x = jax.random.normal(k_x, (B, D), dtype=jnp.float32)
    bound = 1.0 / math.sqrt(D)  # torch.nn.Linear default init range
    w = jax.random.uniform(k_w, (C, D), dtype=jnp.float32,
                           minval=-bound, maxval=bound)
    labels = jax.random.randint(k_l, (B,), 0, C, dtype=jnp.int32)  # ignored

    out = jax.block_until_ready(linear_header(x, labels, w, allow_fast_path=False))
    ref = _reference(x, w)
    assert out.shape == (B, C) and out.dtype == x.dtype
    assert jnp.allclose(out, ref, atol=2e-4, rtol=2e-4), "mismatch vs reference (small)"

    # 2) Ragged shape exercising masked edge blocks and the class-outer
    #    (weight-resident) grid ordering with a multi-block grid.
    B2, D2, C2 = 100, 256, 1000
    k_x, k_w, k_l, key = jax.random.split(key, 4)
    x2 = jax.random.normal(k_x, (B2, D2), dtype=jnp.float32)
    w2 = jax.random.normal(k_w, (C2, D2), dtype=jnp.float32) * (1.0 / math.sqrt(D2))
    labels2 = jax.random.randint(k_l, (B2,), 0, C2, dtype=jnp.int32)  # ignored

    out2 = jax.block_until_ready(linear_header(x2, labels2, w2, tm=64, tn=256))
    ref2 = _reference(x2, w2)
    assert out2.shape == (B2, C2) and out2.dtype == x2.dtype
    assert jnp.allclose(out2, ref2, atol=2e-4, rtol=2e-4), "mismatch vs reference (ragged)"

    print("KERNEL_OK")
</pallas_src>

<mosaic_0001>
module attributes {stable_mosaic.version = 11 : i64} {
  func.func @kernel(%arg0: i32, %arg1: i32, %arg2: i32, %arg3: memref<16x32xf32, #tpu.memory_space<vmem>>, %arg4: memref<256x32xf32, #tpu.memory_space<vmem>>, %arg5: memref<16x256xf32, #tpu.memory_space<vmem>>) attributes {dimension_semantics = [#tpu.dimension_semantics<parallel>, #tpu.dimension_semantics<parallel>, #tpu.dimension_semantics<arbitrary>], iteration_bounds = array<i64: 1, 1, 1>, scalar_prefetch = 0 : i64, scratch_operands = 0 : i64, tpu.core_type = #tpu.core_type<tc>, window_params = [{transform_indices = @transform_0, window_bounds = array<i64: 16, 32>}, {transform_indices = @transform_1, window_bounds = array<i64: 256, 32>}, {transform_indices = @transform_2, window_bounds = array<i64: 16, 256>}]} {
    %c0 = arith.constant 0 : index
    %c0_0 = arith.constant 0 : index
    %0 = vector.load %arg3[%c0, %c0_0] : memref<16x32xf32, #tpu.memory_space<vmem>>, vector<16x32xf32>
    %c0_1 = arith.constant 0 : index
    %c0_2 = arith.constant 0 : index
    %1 = vector.load %arg4[%c0_1, %c0_2] : memref<256x32xf32, #tpu.memory_space<vmem>>, vector<256x32xf32>
    %cst = arith.constant dense<0.000000e+00> : vector<16x256xf32>
    %2 = tpu.matmul %0, %1, %cst {dimension_numbers = #tpu.dot_dimension_numbers<[1], [1], [0], [0], [0, 0, 1, 0], [], []>} : vector<16x32xf32>, vector<256x32xf32>, vector<16x256xf32> -> vector<16x256xf32>
    %c0_3 = arith.constant 0 : index
    %c0_4 = arith.constant 0 : index
    %3 = vector.load %arg5[%c0_3, %c0_4] : memref<16x256xf32, #tpu.memory_space<vmem>>, vector<16x256xf32>
    tpu.vector_store %arg5[%c0_3, %c0_4], %2 {strides = array<i32>} : memref<16x256xf32, #tpu.memory_space<vmem>>, vector<16x256xf32>,
    return
  }
  func.func @transform_0(%arg0: i32, %arg1: i32, %arg2: i32) -> (i32, i32) {
    %c0_i32 = arith.constant 0 : i32
    return %arg1, %arg2 : i32, i32
  }
  func.func @transform_1(%arg0: i32, %arg1: i32, %arg2: i32) -> (i32, i32) {
    %c0_i32 = arith.constant 0 : i32
    return %arg0, %arg2 : i32, i32
  }
  func.func @transform_2(%arg0: i32, %arg1: i32, %arg2: i32) -> (i32, i32) {
    %c0_i32 = arith.constant 0 : i32
    return %arg1, %arg0 : i32, i32
  }
}

</mosaic_0001>

<llo_original>
// kernel: tpu_custom_call.1
$region0: #{tpu_custom_call.1}
  #allocation0 [shape = 'u32[]', space=smem, size = 0x4, offset = 0x4, fixed_abs, tag = 'smem constant byte address 0x4 - core index']
  #allocation1 [shape = 'u32[144,128]{1,0:T(1,128)}', space=vmem, size = 0x12000, scoped, tag = 'internal scratch']
  %s0 = inlined_call_operand.vmem [shape: f32[16,32], index: 0, kind: input, shape index: {}]
  %s1 = inlined_call_operand.vmem [shape: f32[256,32], index: 1, kind: input, shape index: {}]
  %s2 = inlined_call_operand.hbm [shape: f32[16,256], index: 2, kind: output, shape index: {}]
  %s3 = sld [smem:[#allocation0]]
  $region18: #{tpu_custom_call.1} parent=0
    _
  %s5 = ssub.s32 1, %s3
  %s6 = scalar_select 0, %s5, %s3
  $region1: #{tpu_custom_call.1} parent=0
    #allocation2 [shape = 'u8[16384]{0}', space=vmem, size = 0x4000, scoped, tag = 'output window, operand 0, single buffered']
    #allocation3 [shape = 's32[1]{0}', space=sflag, size = 0x4, scoped, tag = 'scoped memory for tpu_custom_call.1']
    %7 = vsyncpa [#allocation3], 0
    // Predicated region
    $region2: #{tpu_custom_call.1} parent=1 // pred_check
      _
    $region3: #{tpu_custom_call.1} parent=1 // pred_check_branch
      %9 = sbr.rel (0) target = $region5
    $region4: #{tpu_custom_call.1} parent=1 // pred_region
      _
    $region5: #{tpu_custom_call.1} parent=1 // pred_fallthru
      _
    // Predicated region
    $region6: #{tpu_custom_call.1} parent=1 // pred_check
      _
    $region7: #{tpu_custom_call.1} parent=1 // pred_check_branch
      %11 = sbr.rel (0) target = $region9
    $region8: #{tpu_custom_call.1} parent=1 // pred_region
      _
    $region9: #{tpu_custom_call.1} parent=1 // pred_fallthru
      _
    %v12 = vld [vmem:[%s0] sm:$0xff]
    %v13 = vld [vmem:[%s0 + $0x8] sm:$0xff]
    %v14 = vld [vmem:[%s1] sm:$0xff]
    %v15 = vld [vmem:[%s1 + $0x8] sm:$0xff]
    %v16 = vld [vmem:[%s1 + $0x10] sm:$0xff]
    %v17 = vld [vmem:[%s1 + $0x18] sm:$0xff]
    %v18 = vld [vmem:[%s1 + $0x20] sm:$0xff]
    %v19 = vld [vmem:[%s1 + $0x28] sm:$0xff]
    %v20 = vld [vmem:[%s1 + $0x30] sm:$0xff]
    %v21 = vld [vmem:[%s1 + $0x38] sm:$0xff]
    %v22 = vld [vmem:[%s1 + $0x40] sm:$0xff]
    %v23 = vld [vmem:[%s1 + $0x48] sm:$0xff]
    %v24 = vld [vmem:[%s1 + $0x50] sm:$0xff]
    %v25 = vld [vmem:[%s1 + $0x58] sm:$0xff]
    %v26 = vld [vmem:[%s1 + $0x60] sm:$0xff]
    %v27 = vld [vmem:[%s1 + $0x68] sm:$0xff]
    %v28 = vld [vmem:[%s1 + $0x70] sm:$0xff]
    %v29 = vld [vmem:[%s1 + $0x78] sm:$0xff]
    %v30 = vld [vmem:[%s1 + $0x80] sm:$0xff]
    %v31 = vld [vmem:[%s1 + $0x88] sm:$0xff]
    %v32 = vld [vmem:[%s1 + $0x90] sm:$0xff]
    %v33 = vld [vmem:[%s1 + $0x98] sm:$0xff]
    %v34 = vld [vmem:[%s1 + $0xa0] sm:$0xff]
    %v35 = vld [vmem:[%s1 + $0xa8] sm:$0xff]
    %v36 = vld [vmem:[%s1 + $0xb0] sm:$0xff]
    %v37 = vld [vmem:[%s1 + $0xb8] sm:$0xff]
    %v38 = vld [vmem:[%s1 + $0xc0] sm:$0xff]
    %v39 = vld [vmem:[%s1 + $0xc8] sm:$0xff]
    %v40 = vld [vmem:[%s1 + $0xd0] sm:$0xff]
    %v41 = vld [vmem:[%s1 + $0xd8] sm:$0xff]
    %v42 = vld [vmem:[%s1 + $0xe0] sm:$0xff]
    %v43 = vld [vmem:[%s1 + $0xe8] sm:$0xff]
    %v44 = vld [vmem:[%s1 + $0xf0] sm:$0xff]
    %v45 = vld [vmem:[%s1 + $0xf8] sm:$0xff]
    %vm46 = vcmask 261120
    %v48 = vsel %vm46, %v12, 0
    %v51 = vsel %vm46, %v13, 0
    %v54 = vsel %vm46, %v14, 0
    %v57 = vsel %vm46, %v15, 0
    %v60 = vsel %vm46, %v16, 0
    %v63 = vsel %vm46, %v17, 0
    %v66 = vsel %vm46, %v18, 0
    %v69 = vsel %vm46, %v19, 0
    %v72 = vsel %vm46, %v20, 0
    %v75 = vsel %vm46, %v21, 0
    %v78 = vsel %vm46, %v22, 0
    %v81 = vsel %vm46, %v23, 0
    %v84 = vsel %vm46, %v24, 0
    %v87 = vsel %vm46, %v25, 0
    %v90 = vsel %vm46, %v26, 0
    %v93 = vsel %vm46, %v27, 0
    %v96 = vsel %vm46, %v28, 0
    %v99 = vsel %vm46, %v29, 0
    %v102 = vsel %vm46, %v30, 0
    %v105 = vsel %vm46, %v31, 0
    %v108 = vsel %vm46, %v32, 0
    %v111 = vsel %vm46, %v33, 0
    %v114 = vsel %vm46, %v34, 0
    %v117 = vsel %vm46, %v35, 0
    %v120 = vsel %vm46, %v36, 0
    %v123 = vsel %vm46, %v37, 0
    %v126 = vsel %vm46, %v38, 0
    %v129 = vsel %vm46, %v39, 0
    %v132 = vsel %vm46, %v40, 0
    %v135 = vsel %vm46, %v41, 0
    %v138 = vsel %vm46, %v42, 0
    %v141 = vsel %vm46, %v43, 0
    %v144 = vsel %vm46, %v44, 0
    %v147 = vsel %vm46, %v45, 0
    %149 = vmatprep.subr.mxu0 0.0
    %150 = vmatpush1.xpose.msra.mxu0 %v54
    %151 = vmatprep.subr.mxu0 0.0
    %152 = vmatpush1.xpose.msra.mxu0 %v57
    %153 = vmatprep.subr.mxu0 0.0
    %154 = vmatpush1.xpose.msra.mxu0 %v60
    %155 = vmatprep.subr.mxu0 0.0
    %156 = vmatpush1.xpose.msra.mxu0 %v63
    %157 = vmatprep.subr.mxu0 0.0
    %158 = vmatpush1.xpose.msra.mxu0 %v66
    %159 = vmatprep.subr.mxu0 0.0
    %160 = vmatpush1.xpose.msra.mxu0 %v69
    %161 = vmatprep.subr.mxu0 0.0
    %162 = vmatpush1.xpose.msra.mxu0 %v72
    %163 = vmatprep.subr.mxu0 0.0
    %164 = vmatpush1.xpose.msra.mxu0 %v75
    %165 = vmatprep.subr.mxu0 0.0
    %166 = vmatpush1.xpose.msra.mxu0 %v78
    %167 = vmatprep.subr.mxu0 0.0
    %168 = vmatpush1.xpose.msra.mxu0 %v81
    %169 = vmatprep.subr.mxu0 0.0
    %170 = vmatpush1.xpose.msra.mxu0 %v84
    %171 = vmatprep.subr.mxu0 0.0
    %172 = vmatpush1.xpose.msra.mxu0 %v87
    %173 = vmatprep.subr.mxu0 0.0
    %174 = vmatpush1.xpose.msra.mxu0 %v90
    %175 = vmatprep.subr.mxu0 0.0
    %176 = vmatpush1.xpose.msra.mxu0 %v93
    %177 = vmatprep.subr.mxu0 0.0
    %178 = vmatpush1.xpose.msra.mxu0 %v96
    %179 = vmatprep.subr.mxu0 0.0
    %180 = vmatpush1.xpose.msra.mxu0 %v99
    %181 = vmatprep.subr.mxu0 0.0
    %182 = vmatpush1.xpose.msra.mxu0 %v102
    %183 = vmatprep.subr.mxu0 0.0
    %184 = vmatpush1.xpose.msra.mxu0 %v105
    %185 = vmatprep.subr.mxu0 0.0
    %186 = vmatpush1.xpose.msra.mxu0 %v108
    %187 = vmatprep.subr.mxu0 0.0
    %188 = vmatpush1.xpose.msra.mxu0 %v111
    %189 = vmatprep.subr.mxu0 0.0
    %190 = vmatpush1.xpose.msra.mxu0 %v114
    %191 = vmatprep.subr.mxu0 0.0
    %192 = vmatpush1.xpose.msra.mxu0 %v117
    %193 = vmatprep.subr.mxu0 0.0
    %194 = vmatpush1.xpose.msra.mxu0 %v120
    %195 = vmatprep.subr.mxu0 0.0
    %196 = vmatpush1.xpose.msra.mxu0 %v123
    %197 = vmatprep.subr.mxu0 0.0
    %198 = vmatpush1.xpose.msra.mxu0 %v126
    %199 = vmatprep.subr.mxu0 0.0
    %200 = vmatpush1.xpose.msra.mxu0 %v129
    %201 = vmatprep.subr.mxu0 0.0
    %202 = vmatpush1.xpose.msra.mxu0 %v132
    %203 = vmatprep.subr.mxu0 0.0
    %204 = vmatpush1.xpose.msra.mxu0 %v135
    %205 = vmatprep.subr.mxu0 0.0
    %206 = vmatpush1.xpose.msra.mxu0 %v138
    %207 = vmatprep.subr.mxu0 0.0
    %208 = vmatpush1.xpose.msra.mxu0 %v141
    %209 = vmatprep.subr.mxu0 0.0
    %210 = vmatpush1.xpose.msra.mxu0 %v144
    %211 = vmatprep.subr.mxu0 0.0
    %212 = vmatpush1.xpose.msra.mxu0 %v147
    %213 = vmatprep.mubr.f32.mxu0 0.0
    %214 = vmatmul.mubr.f32.gmra.mrb[0].mxu0 %v48
    %v215 = vpop.f32.mrb[0].mxu0
    %v216 = vadd.f32 0.0, %v215
    %v217 = vpop.f32.mrb[0].mxu0
    %v218 = vadd.f32 0.0, %v217
    %219 = vmatprep.mubr.f32.mxu0 0.0
    %220 = vmatmul.mubr.f32.gmra.mrb[0].mxu0 %v51
    %v221 = vpop.f32.mrb[0].mxu0
    %v222 = vadd.f32 0.0, %v221
    %v223 = vpop.f32.mrb[0].mxu0
    %v224 = vadd.f32 0.0, %v223
    %225 = vdwg.mxu0
    %226 = vst [vmem:[#allocation2] sm:$0xff] %v216
    %227 = vst [vmem:[#allocation2 + $0x8] sm:$0xff] %v218
    %228 = vst [vmem:[#allocation2 + $0x10] sm:$0xff] %v222
    %229 = vst [vmem:[#allocation2 + $0x18] sm:$0xff] %v224
    // Predicated region
    $region10: #{tpu_custom_call.1} parent=1 // pred_check
      _
    $region11: #{tpu_custom_call.1} parent=1 // pred_check_branch
      %231 = sbr.rel (0) target = $region13
    $region12: #{tpu_custom_call.1} parent=1 // pred_region
      %s233 = ssub.s32 512, 512
      %234 = vsyncadd [#allocation3], %s233
      %s235 = sshll.u32 [#allocation2], 4
      %s236 = int_to_ptr.vmem [resolvable:$true] %s235
      %241 = dma.vmem_to_hbm [thread:$0]  %s236, 512, %s2, [#allocation3], 256, 256, 16
    $region13: #{tpu_custom_call.1} parent=1 // pred_fallthru
      _
    // Predicated region
    $region14: #{tpu_custom_call.1} parent=1 // pred_check
      _
    $region15: #{tpu_custom_call.1} parent=1 // pred_check_branch
      %243 = sbr.rel (0) target = $region17
    $region16: #{tpu_custom_call.1} parent=1 // pred_region
      %244 = dma.done [#allocation3], 512
    $region17: #{tpu_custom_call.1} parent=1 // pred_fallthru
      _
    %245 = vsyncpa [#allocation3], 1

</llo_original>
